<compile_context>
chip_gen: v7x
topology: tpu7x:2x2x1
jax: 0.10.0
libtpu: 0.0.40
codegen_flags: <defaults>
</compile_context>

<pallas_src>
import functools

import jax
import jax.numpy as jnp
from jax.experimental import pallas as pl
from jax.experimental.pallas import tpu as pltpu


def _round_up(x, m):
    return (x + m - 1) // m * m


def _sublane_align(itemsize):
    # native sublane tile for 1 / 2 / >=4 byte dtypes
    return {1: 32, 2: 16}.get(itemsize, 8)


def _sigmoid(x):
    # sigmoid(x) == 0.5*tanh(x/2) + 0.5 : single EUP push (tanh) instead of
    # exp + reciprocal; identical up to EUP approximation error.
    return 0.5 * jnp.tanh(0.5 * x) + 0.5


def _dice_partial_kernel(logits_ref, targets_ref, out_ref, *, num_classes,
                         binary, total_rows):
    # logits_ref : (1, C, TH, W)   targets_ref : (1, TH, W)
    # out_ref    : (1, 1, 8, 128)  row 0 = intersection, row 1 = sum(probs),
    #                              row 2 = sum(targets / one-hot).
    _, _, th, w = logits_ref.shape
    row0 = pl.program_id(1) * th
    rows = jax.lax.broadcasted_iota(jnp.int32, (th, w), 0) + row0
    valid = rows < total_rows               # tail mask for a ragged last block

    if binary:
        p = _sigmoid(logits_ref[0, 0].astype(jnp.float32))
        t = targets_ref[0].astype(jnp.float32)
        # Mask via select BEFORE summing: garbage/NaN tail data cannot leak.
        p = jnp.where(valid, p, 0.0)
        t = jnp.where(valid, t, 0.0)
        inter = jnp.sum(p * t)
        psum = jnp.sum(p)
        tsum = jnp.sum(t)
    else:
        t = targets_ref[0].astype(jnp.int32)
        psum_acc = jnp.zeros((th, w), jnp.float32)
        inter_acc = jnp.zeros((th, w), jnp.float32)
        # Static per-class loop: implicit one-hot, no (C, TH, W) intermediates.
        # TODO(synk): for very large num_classes switch to a fori_loop with a
        # dynamic class index (or a class-chunk grid axis).
        for c in range(num_classes):
            p_c = _sigmoid(logits_ref[0, c].astype(jnp.float32))
            psum_acc = psum_acc + p_c
            inter_acc = inter_acc + jnp.where(t == c, p_c, 0.0)
        # One tail-mask select per accumulator (not per class); select kills
        # any NaN coming from garbage rows of a partial block.
        psum = jnp.sum(jnp.where(valid, psum_acc, 0.0))
        inter = jnp.sum(jnp.where(valid, inter_acc, 0.0))
        in_range = jnp.logical_and(t >= 0, t < num_classes)
        tsum = jnp.sum(jnp.where(jnp.logical_and(valid, in_range), 1.0, 0.0))

    # Lane-dense (8, 128) partials block; each row broadcasts one scalar, the
    # wrapper reads lane 0 of the cross-block sum.  No concatenate needed.
    row_id = jax.lax.broadcasted_iota(jnp.int32, (8, 128), 0)
    vals = jnp.where(row_id == 0, inter,
                     jnp.where(row_id == 1, psum,
                               jnp.where(row_id == 2, tsum, 0.0)))
    out_ref[0, 0] = vals


def dice_loss(logits, targets, smooth=1.0):
    """Pallas TPU DiceLoss.forward.

    logits : (B, C, H, W).  targets : (B, H, W) integer labels when C > 1, or
    a float/bool mask when C == 1.  Returns a scalar float32 loss."""
    B, C, H, W = logits.shape
    if targets.shape != (B, H, W):
        raise ValueError(f"targets shape {targets.shape} != {(B, H, W)}")
    binary = (C == 1)

    l_isz = jnp.dtype(logits.dtype).itemsize
    t_isz = jnp.dtype(targets.dtype).itemsize
    row_align = max(_sublane_align(l_isz), _sublane_align(t_isz))

    # ---- VMEM-budgeted row-block sizing (per-generation) -------------------
    vmem_cap = 64 << 20                      # conservative fallback (v7x-sized)
    try:
        vmem_cap = int(getattr(pltpu.get_tpu_info(), "vmem_capacity_bytes",
                               vmem_cap))
    except Exception:
        pass
    vmem_cap = min(vmem_cap, 128 << 20)
    vmem_limit = min((vmem_cap * 3) // 4, 64 << 20)   # ~64 MiB v5e/v6e, 48 MiB v7x
    budget = (vmem_limit * 3) // 5                    # 2x-buffered inputs + temps

    wp = _round_up(W, 128)                            # physical lanes per row
    bytes_per_row = (2 * C * wp * l_isz               # double-buffered logits
                     + 2 * wp * t_isz                 # double-buffered targets
                     + 6 * wp * 4)                    # f32 accumulators / temps
    th = max(row_align, (budget // bytes_per_row) // row_align * row_align)
    if th >= H:
        th = H                                        # full dim: always legal
    nblk = pl.cdiv(H, th)
    # v7x megacore balance: prefer >= 8 blocks total when the image allows it.
    while B * nblk < 8 and th > row_align:
        new_th = max(row_align, ((th // 2) // row_align) * row_align)
        if new_th == th:
            break
        th = new_th
        nblk = pl.cdiv(H, th)

    # Actual (padded-tile) VMEM requirement; keep the scoped limit above it.
    need = (2 * C * _round_up(th, _sublane_align(l_isz)) * wp * l_isz
            + 2 * _round_up(th, _sublane_align(t_isz)) * wp * t_isz
            + 6 * _round_up(th, 8) * wp * 4 + (2 << 20))
    vmem_limit = min(max(vmem_limit, need), vmem_cap - (2 << 20))
    if need > vmem_limit:
        # TODO(synk): add a class-chunk grid axis so extreme C*W still fits.
        raise ValueError("DiceLoss block does not fit in VMEM; C*W too large.")

    kernel = functools.partial(_dice_partial_kernel, num_classes=C,
                               binary=binary, total_rows=H)

    parts = pl.pallas_call(
        kernel,
        out_shape=jax.ShapeDtypeStruct((B, nblk, 8, 128), jnp.float32),
        grid=(B, nblk),
        in_specs=[
            pl.BlockSpec((1, C, th, W), lambda b, s: (b, 0, s, 0)),
            pl.BlockSpec((1, th, W), lambda b, s: (b, s, 0)),
        ],
        out_specs=pl.BlockSpec((1, 1, 8, 128), lambda b, s: (b, s, 0, 0)),
        compiler_params=pltpu.CompilerParams(
            dimension_semantics=("parallel", "parallel"),
            vmem_limit_bytes=int(vmem_limit),
        ),
    )(logits, targets)

    # ---- tiny cross-block reduction + dice formula in plain JAX ------------
    sums = jnp.sum(parts, axis=(0, 1))       # (8, 128); lanes of a row are equal
    inter, psum, tsum = sums[0, 0], sums[1, 0], sums[2, 0]
    dice = (2.0 * inter + smooth) / jnp.maximum(psum + tsum + smooth, 1e-5)
    return (1.0 - dice).astype(jnp.float32)


def _dice_loss_ref(logits, targets, smooth=1.0):
    """Pure-JAX reference mirroring the PyTorch forward."""
    probs = jax.nn.sigmoid(logits.astype(jnp.float32))
    C = logits.shape[1]
    if C == 1:
        t = targets.astype(jnp.float32)[:, None, :, :]
    else:
        t = jax.nn.one_hot(targets, C, axis=1, dtype=jnp.float32)
    p = probs.reshape(-1)
    t = t.reshape(-1)
    inter = jnp.sum(p * t)
    dice = (2.0 * inter + smooth) / jnp.maximum(jnp.sum(p) + jnp.sum(t) + smooth, 1e-5)
    return 1.0 - dice


if __name__ == "__main__":
    # NOTE: DiceLoss has no learnable parameters; smooth=1.0 as in __init__.
    # The host-side debug `print` inside one_hot_encode is intentionally omitted.
    key = jax.random.PRNGKey(0)
    k1, k2, k3, k4, k5, k6 = jax.random.split(key, 6)

    # multi-class path
    B, C, H, W = 2, 4, 16, 16
    logits = jax.random.normal(k1, (B, C, H, W), dtype=jnp.float32)
    targets = jax.random.randint(k2, (B, H, W), 0, C, dtype=jnp.int32)
    loss = jax.block_until_ready(dice_loss(logits, targets, smooth=1.0))
    ref = _dice_loss_ref(logits, targets, smooth=1.0)
    assert jnp.allclose(loss, ref, rtol=1e-4, atol=5e-5), (loss, ref)

    # binary path (C == 1, float mask targets -> the `unsqueeze(1)` branch)
    blogits = jax.random.normal(k3, (B, 1, H, W), dtype=jnp.float32)
    bmask = (jax.random.uniform(k4, (B, H, W)) > 0.5).astype(jnp.float32)
    bloss = jax.block_until_ready(dice_loss(blogits, bmask, smooth=1.0))
    bref = _dice_loss_ref(blogits, bmask, smooth=1.0)
    assert jnp.allclose(bloss, bref, rtol=1e-4, atol=5e-5), (bloss, bref)

    # ragged row-block path (H not divisible by the chosen block rows)
    Hr = 20
    rlogits = jax.random.normal(k5, (B, C, Hr, W), dtype=jnp.float32)
    rtargets = jax.random.randint(k6, (B, Hr, W), 0, C, dtype=jnp.int32)
    rloss = jax.block_until_ready(dice_loss(rlogits, rtargets, smooth=1.0))
    rref = _dice_loss_ref(rlogits, rtargets, smooth=1.0)
    assert jnp.allclose(rloss, rref, rtol=1e-4, atol=5e-5), (rloss, rref)

    print("KERNEL_OK")
</pallas_src>

<mosaic_0001>
module attributes {stable_mosaic.version = 11 : i64} {
  func.func @_dice_partial_kernel(%arg0: i32, %arg1: i32, %arg2: memref<1x4x8x16xf32, #tpu.memory_space<vmem>>, %arg3: memref<1x8x16xi32, #tpu.memory_space<vmem>>, %arg4: memref<1x1x8x128xf32, #tpu.memory_space<vmem>>) attributes {dimension_semantics = [#tpu.dimension_semantics<parallel>, #tpu.dimension_semantics<parallel>], iteration_bounds = array<i64: 2, 2>, scalar_prefetch = 0 : i64, scratch_operands = 0 : i64, tpu.core_type = #tpu.core_type<tc>, window_params = [{transform_indices = @transform_0, window_bounds = array<i64: 1, 4, 8, 16>}, {transform_indices = @transform_1, window_bounds = array<i64: 1, 8, 16>}, {transform_indices = @transform_2, window_bounds = array<i64: 1, 1, 8, 128>}]} {
    %c8_i32 = arith.constant 8 : i32
    %0 = arith.muli %arg1, %c8_i32 : i32
    %1 = tpu.iota {dimensions = array<i32: 0>} : vector<8x16xi32>
    %2 = vector.broadcast %0 : i32 to vector<8x16xi32>
    %3 = arith.addi %1, %2 : vector<8x16xi32>
    %c16_i32 = arith.constant 16 : i32
    %4 = vector.broadcast %c16_i32 : i32 to vector<8x16xi32>
    %5 = arith.cmpi slt, %3, %4 : vector<8x16xi32>
    %c0 = arith.constant 0 : index
    %c0_0 = arith.constant 0 : index
    %c0_1 = arith.constant 0 : index
    %6 = vector.load %arg3[%c0, %c0_0, %c0_1] : memref<1x8x16xi32, #tpu.memory_space<vmem>>, vector<1x8x16xi32>
    %7 = vector.shape_cast %6 : vector<1x8x16xi32> to vector<8x16xi32>
    %cst = arith.constant 0.000000e+00 : f32
    %8 = vector.broadcast %cst : f32 to vector<8x16xf32>
    %cst_2 = arith.constant 0.000000e+00 : f32
    %9 = vector.broadcast %cst_2 : f32 to vector<8x16xf32>
    %c0_3 = arith.constant 0 : index
    %c0_4 = arith.constant 0 : index
    %c0_5 = arith.constant 0 : index
    %c0_6 = arith.constant 0 : index
    %10 = vector.load %arg2[%c0_3, %c0_4, %c0_5, %c0_6] : memref<1x4x8x16xf32, #tpu.memory_space<vmem>>, vector<1x1x8x16xf32>
    %11 = vector.shape_cast %10 : vector<1x1x8x16xf32> to vector<8x16xf32>
    %cst_7 = arith.constant 5.000000e-01 : f32
    %12 = vector.broadcast %cst_7 : f32 to vector<8x16xf32>
    %13 = arith.mulf %12, %11 : vector<8x16xf32>
    %14 = math.tanh %13 : vector<8x16xf32>
    %cst_8 = arith.constant 5.000000e-01 : f32
    %15 = vector.broadcast %cst_8 : f32 to vector<8x16xf32>
    %16 = arith.mulf %15, %14 : vector<8x16xf32>
    %cst_9 = arith.constant 5.000000e-01 : f32
    %17 = vector.broadcast %cst_9 : f32 to vector<8x16xf32>
    %18 = arith.addf %16, %17 : vector<8x16xf32>
    %19 = arith.addf %8, %18 : vector<8x16xf32>
    %c0_i32 = arith.constant 0 : i32
    %20 = vector.broadcast %c0_i32 : i32 to vector<8x16xi32>
    %21 = arith.cmpi eq, %7, %20 : vector<8x16xi32>
    %cst_10 = arith.constant 0.000000e+00 : f32
    %22 = vector.broadcast %cst_10 : f32 to vector<8x16xf32>
    %23 = arith.select %21, %18, %22 : vector<8x16xi1>, vector<8x16xf32>
    %24 = arith.addf %9, %23 : vector<8x16xf32>
    %c0_11 = arith.constant 0 : index
    %c1 = arith.constant 1 : index
    %c0_12 = arith.constant 0 : index
    %c0_13 = arith.constant 0 : index
    %25 = vector.load %arg2[%c0_11, %c1, %c0_12, %c0_13] : memref<1x4x8x16xf32, #tpu.memory_space<vmem>>, vector<1x1x8x16xf32>
    %26 = vector.shape_cast %25 : vector<1x1x8x16xf32> to vector<8x16xf32>
    %cst_14 = arith.constant 5.000000e-01 : f32
    %27 = vector.broadcast %cst_14 : f32 to vector<8x16xf32>
    %28 = arith.mulf %27, %26 : vector<8x16xf32>
    %29 = math.tanh %28 : vector<8x16xf32>
    %cst_15 = arith.constant 5.000000e-01 : f32
    %30 = vector.broadcast %cst_15 : f32 to vector<8x16xf32>
    %31 = arith.mulf %30, %29 : vector<8x16xf32>
    %cst_16 = arith.constant 5.000000e-01 : f32
    %32 = vector.broadcast %cst_16 : f32 to vector<8x16xf32>
    %33 = arith.addf %31, %32 : vector<8x16xf32>
    %34 = arith.addf %19, %33 : vector<8x16xf32>
    %c1_i32 = arith.constant 1 : i32
    %35 = vector.broadcast %c1_i32 : i32 to vector<8x16xi32>
    %36 = arith.cmpi eq, %7, %35 : vector<8x16xi32>
    %cst_17 = arith.constant 0.000000e+00 : f32
    %37 = vector.broadcast %cst_17 : f32 to vector<8x16xf32>
    %38 = arith.select %36, %33, %37 : vector<8x16xi1>, vector<8x16xf32>
    %39 = arith.addf %24, %38 : vector<8x16xf32>
    %c0_18 = arith.constant 0 : index
    %c2 = arith.constant 2 : index
    %c0_19 = arith.constant 0 : index
    %c0_20 = arith.constant 0 : index
    %40 = vector.load %arg2[%c0_18, %c2, %c0_19, %c0_20] : memref<1x4x8x16xf32, #tpu.memory_space<vmem>>, vector<1x1x8x16xf32>
    %41 = vector.shape_cast %40 : vector<1x1x8x16xf32> to vector<8x16xf32>
    %cst_21 = arith.constant 5.000000e-01 : f32
    %42 = vector.broadcast %cst_21 : f32 to vector<8x16xf32>
    %43 = arith.mulf %42, %41 : vector<8x16xf32>
    %44 = math.tanh %43 : vector<8x16xf32>
    %cst_22 = arith.constant 5.000000e-01 : f32
    %45 = vector.broadcast %cst_22 : f32 to vector<8x16xf32>
    %46 = arith.mulf %45, %44 : vector<8x16xf32>
    %cst_23 = arith.constant 5.000000e-01 : f32
    %47 = vector.broadcast %cst_23 : f32 to vector<8x16xf32>
    %48 = arith.addf %46, %47 : vector<8x16xf32>
    %49 = arith.addf %34, %48 : vector<8x16xf32>
    %c2_i32 = arith.constant 2 : i32
    %50 = vector.broadcast %c2_i32 : i32 to vector<8x16xi32>
    %51 = arith.cmpi eq, %7, %50 : vector<8x16xi32>
    %cst_24 = arith.constant 0.000000e+00 : f32
    %52 = vector.broadcast %cst_24 : f32 to vector<8x16xf32>
    %53 = arith.select %51, %48, %52 : vector<8x16xi1>, vector<8x16xf32>
    %54 = arith.addf %39, %53 : vector<8x16xf32>
    %c0_25 = arith.constant 0 : index
    %c3 = arith.constant 3 : index
    %c0_26 = arith.constant 0 : index
    %c0_27 = arith.constant 0 : index
    %55 = vector.load %arg2[%c0_25, %c3, %c0_26, %c0_27] : memref<1x4x8x16xf32, #tpu.memory_space<vmem>>, vector<1x1x8x16xf32>
    %56 = vector.shape_cast %55 : vector<1x1x8x16xf32> to vector<8x16xf32>
    %cst_28 = arith.constant 5.000000e-01 : f32
    %57 = vector.broadcast %cst_28 : f32 to vector<8x16xf32>
    %58 = arith.mulf %57, %56 : vector<8x16xf32>
    %59 = math.tanh %58 : vector<8x16xf32>
    %cst_29 = arith.constant 5.000000e-01 : f32
    %60 = vector.broadcast %cst_29 : f32 to vector<8x16xf32>
    %61 = arith.mulf %60, %59 : vector<8x16xf32>
    %cst_30 = arith.constant 5.000000e-01 : f32
    %62 = vector.broadcast %cst_30 : f32 to vector<8x16xf32>
    %63 = arith.addf %61, %62 : vector<8x16xf32>
    %64 = arith.addf %49, %63 : vector<8x16xf32>
    %c3_i32 = arith.constant 3 : i32
    %65 = vector.broadcast %c3_i32 : i32 to vector<8x16xi32>
    %66 = arith.cmpi eq, %7, %65 : vector<8x16xi32>
    %cst_31 = arith.constant 0.000000e+00 : f32
    %67 = vector.broadcast %cst_31 : f32 to vector<8x16xf32>
    %68 = arith.select %66, %63, %67 : vector<8x16xi1>, vector<8x16xf32>
    %69 = arith.addf %54, %68 : vector<8x16xf32>
    %cst_32 = arith.constant 0.000000e+00 : f32
    %70 = vector.broadcast %cst_32 : f32 to vector<8x16xf32>
    %71 = arith.select %5, %64, %70 : vector<8x16xi1>, vector<8x16xf32>
    %72 = vector.shape_cast %71 : vector<8x16xf32> to vector<1x8x16xf32>
    %cst_33 = arith.constant dense<0.000000e+00> : vector<1xf32>
    %73 = vector.multi_reduction <add>, %72, %cst_33 [1, 2] : vector<1x8x16xf32> to vector<1xf32>
    %74 = vector.shape_cast %73 : vector<1xf32> to vector<1x1x1xf32>
    %75 = vector.extract %74[0, 0, 0] : f32 from vector<1x1x1xf32>
    %cst_34 = arith.constant 0.000000e+00 : f32
    %76 = vector.broadcast %cst_34 : f32 to vector<8x16xf32>
    %77 = arith.select %5, %69, %76 : vector<8x16xi1>, vector<8x16xf32>
    %78 = vector.shape_cast %77 : vector<8x16xf32> to vector<1x8x16xf32>
    %cst_35 = arith.constant dense<0.000000e+00> : vector<1xf32>
    %79 = vector.multi_reduction <add>, %78, %cst_35 [1, 2] : vector<1x8x16xf32> to vector<1xf32>
    %80 = vector.shape_cast %79 : vector<1xf32> to vector<1x1x1xf32>
    %81 = vector.extract %80[0, 0, 0] : f32 from vector<1x1x1xf32>
    %c0_i32_36 = arith.constant 0 : i32
    %82 = vector.broadcast %c0_i32_36 : i32 to vector<8x16xi32>
    %83 = arith.cmpi sge, %7, %82 : vector<8x16xi32>
    %c4_i32 = arith.constant 4 : i32
    %84 = vector.broadcast %c4_i32 : i32 to vector<8x16xi32>
    %85 = arith.cmpi slt, %7, %84 : vector<8x16xi32>
    %86 = arith.andi %83, %85 : vector<8x16xi1>
    %87 = arith.andi %5, %86 : vector<8x16xi1>
    %cst_37 = arith.constant 1.000000e+00 : f32
    %cst_38 = arith.constant 0.000000e+00 : f32
    %88 = vector.broadcast %cst_37 : f32 to vector<8x16xf32>
    %89 = vector.broadcast %cst_38 : f32 to vector<8x16xf32>
    %90 = arith.select %87, %88, %89 : vector<8x16xi1>, vector<8x16xf32>
    %91 = vector.shape_cast %90 : vector<8x16xf32> to vector<1x8x16xf32>
    %cst_39 = arith.constant dense<0.000000e+00> : vector<1xf32>
    %92 = vector.multi_reduction <add>, %91, %cst_39 [1, 2] : vector<1x8x16xf32> to vector<1xf32>
    %93 = vector.shape_cast %92 : vector<1xf32> to vector<1x1x1xf32>
    %94 = vector.extract %93[0, 0, 0] : f32 from vector<1x1x1xf32>
    %95 = tpu.iota {dimensions = array<i32: 0>} : vector<8x128xi32>
    %c0_i32_40 = arith.constant 0 : i32
    %96 = vector.broadcast %c0_i32_40 : i32 to vector<8x128xi32>
    %97 = arith.cmpi eq, %95, %96 : vector<8x128xi32>
    %c1_i32_41 = arith.constant 1 : i32
    %98 = vector.broadcast %c1_i32_41 : i32 to vector<8x128xi32>
    %99 = arith.cmpi eq, %95, %98 : vector<8x128xi32>
    %c2_i32_42 = arith.constant 2 : i32
    %100 = vector.broadcast %c2_i32_42 : i32 to vector<8x128xi32>
    %101 = arith.cmpi eq, %95, %100 : vector<8x128xi32>
    %cst_43 = arith.constant 0.000000e+00 : f32
    %102 = vector.broadcast %94 : f32 to vector<8x128xf32>
    %103 = vector.broadcast %cst_43 : f32 to vector<8x128xf32>
    %104 = arith.select %101, %102, %103 : vector<8x128xi1>, vector<8x128xf32>
    %105 = vector.broadcast %75 : f32 to vector<8x128xf32>
    %106 = arith.select %99, %105, %104 : vector<8x128xi1>, vector<8x128xf32>
    %107 = vector.broadcast %81 : f32 to vector<8x128xf32>
    %108 = arith.select %97, %107, %106 : vector<8x128xi1>, vector<8x128xf32>
    %c0_44 = arith.constant 0 : index
    %c0_45 = arith.constant 0 : index
    %c0_46 = arith.constant 0 : index
    %c0_47 = arith.constant 0 : index
    %109 = vector.load %arg4[%c0_44, %c0_45, %c0_46, %c0_47] : memref<1x1x8x128xf32, #tpu.memory_space<vmem>>, vector<1x1x8x128xf32>
    %110 = vector.shape_cast %109 : vector<1x1x8x128xf32> to vector<8x128xf32>
    %111 = vector.shape_cast %108 : vector<8x128xf32> to vector<1x1x8x128xf32>
    tpu.vector_store %arg4[%c0_44, %c0_45, %c0_46, %c0_47], %111 {strides = array<i32>} : memref<1x1x8x128xf32, #tpu.memory_space<vmem>>, vector<1x1x8x128xf32>,
    return
  }
  func.func @transform_0(%arg0: i32, %arg1: i32) -> (i32, i32, i32, i32) {
    %c0_i32 = arith.constant 0 : i32
    %c0_i32_0 = arith.constant 0 : i32
    %c0_i32_1 = arith.constant 0 : i32
    return %arg0, %c0_i32, %arg1, %c0_i32_0 : i32, i32, i32, i32
  }
  func.func @transform_1(%arg0: i32, %arg1: i32) -> (i32, i32, i32) {
    %c0_i32 = arith.constant 0 : i32
    %c0_i32_0 = arith.constant 0 : i32
    return %arg0, %arg1, %c0_i32 : i32, i32, i32
  }
  func.func @transform_2(%arg0: i32, %arg1: i32) -> (i32, i32, i32, i32) {
    %c0_i32 = arith.constant 0 : i32
    %c0_i32_0 = arith.constant 0 : i32
    %c0_i32_1 = arith.constant 0 : i32
    return %arg0, %arg1, %c0_i32, %c0_i32_0 : i32, i32, i32, i32
  }
}

</mosaic_0001>

<llo_original>
// kernel: tpu_custom_call.1
$region0: #{tpu_custom_call.1}
  #allocation0 [shape = 'u32[]', space=smem, size = 0x4, offset = 0x4, fixed_abs, tag = 'smem constant byte address 0x4 - core index']
  #allocation1 [shape = 'u32[144,128]{1,0:T(1,128)}', space=vmem, size = 0x12000, scoped, tag = 'internal scratch']
  %s0 = inlined_call_operand.hbm [shape: f32[2,4,16,16], index: 0, kind: input, shape index: {}]
  %s1 = inlined_call_operand.hbm [shape: s32[2,16,16], index: 1, kind: input, shape index: {}]
  %s2 = inlined_call_operand.hbm [shape: f32[2,2,8,128], index: 2, kind: output, shape index: {}]
  %s3 = sld [smem:[#allocation0]]
  $region49: #{tpu_custom_call.1} parent=0
    _
  %s5 = ssub.s32 1, %s3
  %s6 = scalar_select 0, %s5, %s3
  $region1: #{tpu_custom_call.1} parent=0
    #allocation2 [shape = 'u8[32768]{0}', space=vmem, size = 0x8000, scoped, tag = 'input window, operand 0']
    #allocation3 [shape = 's32[2]{0}', space=sflag, size = 0x8, scoped, tag = 'scoped memory for tpu_custom_call.1']
    #allocation4 [shape = 's32[2]{0}', space=sflag, size = 0x8, scoped, tag = 'scoped memory for tpu_custom_call.1']
    #allocation5 [shape = 'u8[8192]{0}', space=vmem, size = 0x2000, scoped, tag = 'input window, operand 1']
    #allocation6 [shape = 's32[2]{0}', space=sflag, size = 0x8, scoped, tag = 'scoped memory for tpu_custom_call.1']
    #allocation7 [shape = 'u8[8192]{0}', space=vmem, size = 0x2000, scoped, tag = 'output window, operand 0']
    %7 = vsyncpa [#allocation3], 0
    %s8 = scalar_lea.sflag [#allocation3], 1
    %9 = vsyncpa %s8, 0
    %10 = vsyncpa [#allocation6], 0
    %s11 = scalar_lea.sflag [#allocation6], 1
    %12 = vsyncpa %s11, 0
    %13 = vsyncpa [#allocation4], 0
    %s14 = scalar_lea.sflag [#allocation4], 1
    %15 = vsyncpa %s14, 0
    loop: start=0, step=1, limit=6
    $region2: #{tpu_custom_call.1} parent=1 // loop_pre_header
      _
    $region3: #{tpu_custom_call.1} parent=1 // loop_header
      %s17 = sphi 0, %s21
      %p18 = scmp.ge.s32.totalorder %s17, 6
      %s24 = sphi 0, %s36
      %s25 = sphi 0, %s32
      %s26 = sphi 0, %s24
      %s27 = sphi 0, %s25
      %s28 = sphi 0, %s26
      %s29 = sphi 0, %s27
      %s41 = sphi 0, %s43
      %s44 = sphi 0, %s41
      %s45 = sphi 0, %s44
      %s61 = sphi 0, %s45
      %s69 = sphi 0, %s71
      %s72 = sphi 0, %s69
      %s73 = sphi 0, %s72
      %s89 = sphi 0, %s73
      %s97 = sphi 0, %s99
      %s100 = sphi 0, %s97
      %s101 = sphi 0, %s100
      %s117 = sphi 0, %s101
    $region4: #{tpu_custom_call.1} parent=1 // loop_header_branch
      %20 = sbr.rel (%p18) target = $region8
    $region5: #{tpu_custom_call.1} parent=1 // loop_body
      %s22 = ssub.s32 %s17, 1
      %s23 = ssub.s32 %s17, 2
      %s30 = sadd.s32 1, %s25
      %p31 = scmp.ge.s32.totalorder %s30, 2
      %s32 = scalar_select %p31, 0, %s30
      %s33 = sadd.s32 1, %s24
      %s34 = scalar_select %p31, %s33, %s24
      %p35 = scmp.ge.s32.totalorder %s34, 2
      %s36 = scalar_select %p35, 0, %s34
      %s37 = ssub.s32 %s24, %s36
      %s38 = ssub.s32 %s25, %s32
      %s39 = sor.u32 %s37, %s38
      %p40 = scmp.eq.s32.totalorder %s39, 0
      %s42 = sadd.s32 %s41, 1
      %s43 = scalar_select %p40, %s41, %s42
      %p46 = pneg %p40
      %p47 = scmp.eq.s32.totalorder %s17, 3
      %p48 = por %p46, %p47
      %p49 = scmp.ne.s32.totalorder %s41, %s44
      %p50 = scmp.eq.s32.totalorder %s17, 0
      %p51 = por %p49, %p50
      %p52 = scmp.ne.s32.totalorder %s41, %s44
      %p53 = scmp.eq.s32.totalorder %s22, 3
      %p54 = por %p52, %p53
      %p55 = scmp.ne.s32.totalorder %s44, %s45
      %p56 = scmp.eq.s32.totalorder %s22, 0
      %p57 = por %p55, %p56
      %p58 = scmp.ne.s32.totalorder %s44, %s45
      %p59 = scmp.eq.s32.totalorder %s23, 3
      %p60 = por %p58, %p59
      %p62 = scmp.ne.s32.totalorder %s45, %s61
      %p63 = scmp.eq.s32.totalorder %s23, 0
      %p64 = por %p62, %p63
      %s65 = ssub.s32 %s24, %s36
      %s66 = ssub.s32 %s25, %s32
      %s67 = sor.u32 %s65, %s66
      %p68 = scmp.eq.s32.totalorder %s67, 0
      %s70 = sadd.s32 %s69, 1
      %s71 = scalar_select %p68, %s69, %s70
      %p74 = pneg %p68
      %p75 = scmp.eq.s32.totalorder %s17, 3
      %p76 = por %p74, %p75
      %p77 = scmp.ne.s32.totalorder %s69, %s72
      %p78 = scmp.eq.s32.totalorder %s17, 0
      %p79 = por %p77, %p78
      %p80 = scmp.ne.s32.totalorder %s69, %s72
      %p81 = scmp.eq.s32.totalorder %s22, 3
      %p82 = por %p80, %p81
      %p83 = scmp.ne.s32.totalorder %s72, %s73
      %p84 = scmp.eq.s32.totalorder %s22, 0
      %p85 = por %p83, %p84
      %p86 = scmp.ne.s32.totalorder %s72, %s73
      %p87 = scmp.eq.s32.totalorder %s23, 3
      %p88 = por %p86, %p87
      %p90 = scmp.ne.s32.totalorder %s73, %s89
      %p91 = scmp.eq.s32.totalorder %s23, 0
      %p92 = por %p90, %p91
      %s93 = ssub.s32 %s24, %s36
      %s94 = ssub.s32 %s25, %s32
      %s95 = sor.u32 %s93, %s94
      %p96 = scmp.eq.s32.totalorder %s95, 0
      %s98 = sadd.s32 %s97, 1
      %s99 = scalar_select %p96, %s97, %s98
      %p102 = pneg %p96
      %p103 = scmp.eq.s32.totalorder %s17, 3
      %p104 = por %p102, %p103
      %p105 = scmp.ne.s32.totalorder %s97, %s100
      %p106 = scmp.eq.s32.totalorder %s17, 0
      %p107 = por %p105, %p106
      %p108 = scmp.ne.s32.totalorder %s97, %s100
      %p109 = scmp.eq.s32.totalorder %s22, 3
      %p110 = por %p108, %p109
      %p111 = scmp.ne.s32.totalorder %s100, %s101
      %p112 = scmp.eq.s32.totalorder %s22, 0
      %p113 = por %p111, %p112
      %p114 = scmp.ne.s32.totalorder %s100, %s101
      %p115 = scmp.eq.s32.totalorder %s23, 3
      %p116 = por %p114, %p115
      %p118 = scmp.ne.s32.totalorder %s101, %s117
      %p119 = scmp.eq.s32.totalorder %s23, 0
      %p120 = por %p118, %p119
      %p121 = scmp.le.s32.totalorder 1, %s17
      %p122 = scmp.lt.s32.totalorder %s17, 5
      %p123 = pnand %p121, %p122
      %p124 = pneg %p123
      // Predicated region
      $region9: #{tpu_custom_call.1} parent=5 // pred_check
        _
      $region10: #{tpu_custom_call.1} parent=5 // pred_check_branch
        %126 = sbr.rel (%p123) target = $region12
      $region11: #{tpu_custom_call.1} parent=5 // pred_region
        %s127 = ssub.s32 %s17, 1
      $region12: #{tpu_custom_call.1} parent=5 // pred_fallthru
        _
      %p128 = scmp.lt.s32.totalorder %s17, 4
      // Predicated region
      $region13: #{tpu_custom_call.1} parent=5 // pred_check
        %p129 = pneg %p128
      $region14: #{tpu_custom_call.1} parent=5 // pred_check_branch
        %131 = sbr.rel (%p129) target = $region16
      $region15: #{tpu_custom_call.1} parent=5 // pred_region
        // Predicated region
        $region17: #{tpu_custom_call.1} parent=15 // pred_check
          %p132 = pneg %p51
        $region18: #{tpu_custom_call.1} parent=15 // pred_check_branch
          %134 = sbr.rel (%p132) target = $region20
        $region19: #{tpu_custom_call.1} parent=15 // pred_region
          %s135 = sand.u32 %s41, 1
          %s136 = scalar_lea.sflag [#allocation3], %s135
          %s137 = sand.u32 %s41, 1
          %s138 = smul.addr %s137, 32
          %s139 = scalar_lea.vmem [#allocation2], %s138
          %s141 = ssub.s32 512, 512
          %142 = vsyncadd %s136, %s141
          %s143 = smul.addr %s24, 8
          %s144 = sadd.s32 %s25, %s143
          %s145 = smul.addr %s144, 128
          %s146 = scalar_lea.hbm %s0, %s145
          %s147 = sshll.u32 %s139, 4
          %s148 = int_to_ptr.vmem [resolvable:$true] %s147
          %153 = dma.hbm_to_vmem [thread:$0]  %s146, 512, %s148, %s136, 256, 128, 8
        $region20: #{tpu_custom_call.1} parent=15 // pred_fallthru
          _
        // Predicated region
        $region21: #{tpu_custom_call.1} parent=15 // pred_check
          %p154 = pneg %p79
        $region22: #{tpu_custom_call.1} parent=15 // pred_check_branch
          %156 = sbr.rel (%p154) target = $region24
        $region23: #{tpu_custom_call.1} parent=15 // pred_region
          %s157 = sand.u32 %s69, 1
          %s158 = scalar_lea.sflag [#allocation6], %s157
          %s159 = sand.u32 %s69, 1
          %s160 = smul.addr %s159, 8
          %s161 = scalar_lea.vmem [#allocation5], %s160
          %s163 = ssub.s32 128, 128
          %164 = vsyncadd %s158, %s163
          %s165 = smul.addr %s24, 2
          %s166 = sadd.s32 %s25, %s165
          %s167 = smul.addr %s166, 128
          %s168 = scalar_lea.hbm %s1, %s167
          %s170 = sshll.u32 %s161, 4
          %s171 = int_to_ptr.vmem [resolvable:$true] %s170
          %173 = dma.hbm_to_vmem [thread:$0]  %s168, 128, %s171, %s158
        $region24: #{tpu_custom_call.1} parent=15 // pred_fallthru
          _
      $region16: #{tpu_custom_call.1} parent=5 // pred_fallthru
        _
      %p174 = scmp.le.s32.totalorder 1, %s17
      %p175 = scmp.lt.s32.totalorder %s17, 5
      %p176 = pnand %p174, %p175
      %p177 = pneg %p176
      // Predicated region
      $region25: #{tpu_custom_call.1} parent=5 // pred_check
        _
      $region26: #{tpu_custom_call.1} parent=5 // pred_check_branch
        %179 = sbr.rel (%p176) target = $region28
      $region27: #{tpu_custom_call.1} parent=5 // pred_region
        %s180 = ssub.s32 %s17, 1
        %s181 = sand.u32 %s44, 1
        %s182 = scalar_lea.sflag [#allocation3], %s181
        %s183 = sand.u32 %s44, 1
        %s184 = smul.addr %s183, 32
        %s185 = scalar_lea.vmem [#allocation2], %s184
        // Predicated region
        $region29: #{tpu_custom_call.1} parent=27 // pred_check
          %p186 = pneg %p57
        $region30: #{tpu_custom_call.1} parent=27 // pred_check_branch
          %188 = sbr.rel (%p186) target = $region32
        $region31: #{tpu_custom_call.1} parent=27 // pred_region
          %189 = dma.done %s182, 512
        $region32: #{tpu_custom_call.1} parent=27 // pred_fallthru
          _
        %s190 = sand.u32 %s72, 1
        %s191 = scalar_lea.sflag [#allocation6], %s190
        %s192 = sand.u32 %s72, 1
        %s193 = smul.addr %s192, 8
        %s194 = scalar_lea.vmem [#allocation5], %s193
        // Predicated region
        $region33: #{tpu_custom_call.1} parent=27 // pred_check
          %p195 = pneg %p85
        $region34: #{tpu_custom_call.1} parent=27 // pred_check_branch
          %197 = sbr.rel (%p195) target = $region36
        $region35: #{tpu_custom_call.1} parent=27 // pred_region
          %198 = dma.done %s191, 128
        $region36: #{tpu_custom_call.1} parent=27 // pred_fallthru
          _
        %s199 = sand.u32 %s44, 1
        %s200 = scalar_lea.sflag [#allocation3], %s199
        %s201 = sand.u32 %s44, 1
        %s202 = smul.addr %s201, 32
        %s203 = scalar_lea.vmem [#allocation2], %s202
        %p204 = pneg %p57
        %p205 = pneg %p54
        %s206 = sand.u32 %s72, 1
        %s207 = scalar_lea.sflag [#allocation6], %s206
        %s208 = sand.u32 %s72, 1
        %s209 = smul.addr %s208, 8
        %s210 = scalar_lea.vmem [#allocation5], %s209
        %p211 = pneg %p85
        %p212 = pneg %p82
        %p213 = pneg %p113
        %p214 = pneg %p110
        %s215 = sand.u32 %s100, 1
        %s216 = scalar_lea.sflag [#allocation4], %s215
        %s217 = sand.u32 %s100, 1
        %s218 = smul.addr %s217, 8
        %s219 = scalar_lea.vmem [#allocation7], %s218
        %s220 = smul.u32 %s27, 8
        %v221 = vlaneseq
        %v222 = vshrl.u32 %v221, 7
        %v223 = vstv %s220
        %v224 = vadd.s32 %v222, %v223
        %vm225 = vcmp.lt.s32.totalorder %v224, 16
        %v226 = vld [vmem:[%s194] sm:$0xff]
        %v227 = vld [vmem:[%s185] sm:$0xff]
        %v228 = vmul.f32 %v227, 0.5
        %v229 = vtanh.pop %v228
        %v230 = vmul.f32 %v229, 0.5
        %v231 = vadd.f32 %v230, 0.5
        %v232 = vadd.f32 %v231, 0.0
        %vm233 = vcmp.eq.s32.totalorder %v226, 0
        %v234 = vsel %vm233, %v231, 0.0
        %v235 = vadd.f32 %v234, 0.0
        %s236 = scalar_lea.vmem %s185, 8 [#allocation2]
        %v237 = vld [vmem:[%s236] sm:$0xff]
        %v238 = vmul.f32 %v237, 0.5
        %v239 = vtanh.pop %v238
        %v240 = vmul.f32 %v239, 0.5
        %v241 = vadd.f32 %v240, 0.5
        %v242 = vadd.f32 %v232, %v241
        %vm243 = vcmp.eq.s32.totalorder %v226, 1
        %v244 = vsel %vm243, %v241, 0.0
        %v245 = vadd.f32 %v235, %v244
        %s246 = scalar_lea.vmem %s185, 16 [#allocation2]
        %v247 = vld [vmem:[%s246] sm:$0xff]
        %v248 = vmul.f32 %v247, 0.5
        %v249 = vtanh.pop %v248
        %v250 = vmul.f32 %v249, 0.5
        %v251 = vadd.f32 %v250, 0.5
        %v252 = vadd.f32 %v242, %v251
        %vm253 = vcmp.eq.s32.totalorder %v226, 2
        %v254 = vsel %vm253, %v251, 0.0
        %v255 = vadd.f32 %v245, %v254
        %s256 = scalar_lea.vmem %s185, 24 [#allocation2]
        %v257 = vld [vmem:[%s256] sm:$0xff]
        %v258 = vmul.f32 %v257, 0.5
        %v259 = vtanh.pop %v258
        %v260 = vmul.f32 %v259, 0.5
        %v261 = vadd.f32 %v260, 0.5
        %v262 = vadd.f32 %v252, %v261
        %vm263 = vcmp.eq.s32.totalorder %v226, 3
        %v264 = vsel %vm263, %v261, 0.0
        %v265 = vadd.f32 %v255, %v264
        %v266 = vsel %vm225, %v262, 0.0
        %vm267 = vcmask 130048
        %v268 = vsel %vm267, %v266, 0.0
        %269 = vadd.xlane.f32.xlu0 %v268
        %v270 = vpop.xlane.xlu0 %269
        %v271 = vrot.slane %v270, 4
        %v272 = vadd.f32 %v270, %v271
        %v273 = vrot.slane %v272, 2
        %v274 = vadd.f32 %v272, %v273
        %v275 = vrot.slane %v274, 1
        %v276 = vadd.f32 %v274, %v275
        %s277 = vtos %v276
        %v278 = vsel %vm225, %v265, 0.0
        %v279 = vsel %vm267, %v278, 0.0
        %280 = vadd.xlane.f32.xlu0 %v279
        %v281 = vpop.xlane.xlu0 %280
        %v282 = vrot.slane %v281, 4
        %v283 = vadd.f32 %v281, %v282
        %v284 = vrot.slane %v283, 2
        %v285 = vadd.f32 %v283, %v284
        %v286 = vrot.slane %v285, 1
        %v287 = vadd.f32 %v285, %v286
        %s288 = vtos %v287
        %vm289 = vcmp.ge.s32.totalorder %v226, 0
        %vm290 = vcmp.lt.s32.totalorder %v226, 4
        %vm291 = vmand %vm289, %vm290
        %vm292 = vmand %vm225, %vm291
        %v293 = vsel %vm292, 1.0, 0.0
        %v294 = vsel %vm267, %v293, 0.0
        %295 = vadd.xlane.f32.xlu0 %v294
        %v296 = vpop.xlane.xlu0 %295
        %v297 = vrot.slane %v296, 4
        %v298 = vadd.f32 %v296, %v297
        %v299 = vrot.slane %v298, 2
        %v300 = vadd.f32 %v298, %v299
        %v301 = vrot.slane %v300, 1
        %v302 = vadd.f32 %v300, %v301
        %s303 = vtos %v302
        %vm304 = vcmp.eq.s32.totalorder %v222, 0
        %vm305 = vcmp.eq.s32.totalorder %v222, 1
        %vm306 = vcmp.eq.s32.totalorder %v222, 2
        %v307 = vstv %s303
        %v308 = vsel %vm306, %v307, 0.0
        %v309 = vstv %s277
        %v310 = vsel %vm305, %v309, %v308
        %v311 = vstv %s288
        %v312 = vsel %vm304, %v311, %v310
        %313 = vst [vmem:[%s219] sm:$0xff] %v312
        %s314 = sand.u32 %s100, 1
        %s315 = scalar_lea.sflag [#allocation4], %s314
        %s316 = sand.u32 %s100, 1
        %s317 = smul.addr %s316, 8
        %s318 = scalar_lea.vmem [#allocation7], %s317
        // Predicated region
        $region37: #{tpu_custom_call.1} parent=27 // pred_check
          %p319 = pneg %p110
        $region38: #{tpu_custom_call.1} parent=27 // pred_check_branch
          %321 = sbr.rel (%p319) target = $region40
        $region39: #{tpu_custom_call.1} parent=27 // pred_region
          %s323 = ssub.s32 128, 128
          %324 = vsyncadd %s315, %s323
          %s325 = smul.addr %s26, 2
          %s326 = sadd.s32 %s27, %s325
          %s327 = smul.addr %s326, 128
          %s328 = scalar_lea.hbm %s2, %s327
          %s330 = sshll.u32 %s318, 4
          %s331 = int_to_ptr.vmem [resolvable:$true] %s330
          %333 = dma.vmem_to_hbm [thread:$0]  %s331, 128, %s328, %s315
        $region40: #{tpu_custom_call.1} parent=27 // pred_fallthru
          _
      $region28: #{tpu_custom_call.1} parent=5 // pred_fallthru
        _
      %p334 = scmp.le.s32.totalorder 2, %s17
      // Predicated region
      $region41: #{tpu_custom_call.1} parent=5 // pred_check
        %p335 = pneg %p334
      $region42: #{tpu_custom_call.1} parent=5 // pred_check_branch
        %337 = sbr.rel (%p335) target = $region44
      $region43: #{tpu_custom_call.1} parent=5 // pred_region
        %s338 = ssub.s32 %s17, 2
        // Predicated region
        $region45: #{tpu_custom_call.1} parent=43 // pred_check
          %p339 = pneg %p116
        $region46: #{tpu_custom_call.1} parent=43 // pred_check_branch
          %341 = sbr.rel (%p339) target = $region48
        $region47: #{tpu_custom_call.1} parent=43 // pred_region
          %s342 = sand.u32 %s101, 1
          %s343 = scalar_lea.sflag [#allocation4], %s342
          %s344 = sand.u32 %s101, 1
          %s345 = smul.addr %s344, 8
          %s346 = scalar_lea.vmem [#allocation7], %s345
          %347 = dma.done %s343, 128
        $region48: #{tpu_custom_call.1} parent=43 // pred_fallthru
          _
      $region44: #{tpu_custom_call.1} parent=5 // pred_fallthru
        _
    $region6: #{tpu_custom_call.1} parent=1 // loop_footer
      %s21 = sadd.s32 1, %s17
    $region7: #{tpu_custom_call.1} parent=1 // loop_footer_branch
      %16 = sbr.rel target = $region3
    $region8: #{tpu_custom_call.1} parent=1 // loop_exit
      _
    %348 = vsyncpa [#allocation3], 1
    %s349 = scalar_lea.sflag [#allocation3], 1
    %350 = vsyncpa %s349, 1
    %351 = vsyncpa [#allocation6], 1
    %s352 = scalar_lea.sflag [#allocation6], 1
    %353 = vsyncpa %s352, 1
    %354 = vsyncpa [#allocation4], 1
    %s355 = scalar_lea.sflag [#allocation4], 1
    %356 = vsyncpa %s355, 1

</llo_original>
